<compile_context>
chip_gen: v7x
topology: tpu7x:2x2x1
jax: 0.10.0
libtpu: 0.0.40
codegen_flags: <defaults>
</compile_context>

<pallas_src>
import math

import jax
import jax.numpy as jnp
from jax.experimental import pallas as pl
from jax.experimental.pallas import tpu as pltpu


def _round_up(x, m):
    return ((x + m - 1) // m) * m


def _vmem_capacity_bytes():
    try:
        return int(pltpu.get_tpu_info().vmem_capacity_bytes)
    except Exception:
        # Conservative per-TensorCore fallback (v7x has 64 MiB / TC).
        return 64 * 1024 * 1024


def _lora_kernel(x_ref, wa_ref, wb_ref, o_ref, xa_ref):
    # x_ref: (tm, D), wa_ref: (D, r_pad), wb_ref: (r_pad, tn),
    # o_ref: (tm, tn), xa_ref (VMEM scratch): (tm, r_pad) f32.
    #
    # The row tile and the first matmul are invariant along the out-feature
    # (j) axis: compute x @ Wa once at j == 0 and reuse it for every j tile,
    # keeping the kernel HBM-bound instead of re-driving the MXU per j.
    @pl.when(pl.program_id(1) == 0)
    def _():
        xa_ref[...] = jnp.dot(x_ref[...], wa_ref[...],
                              preferred_element_type=jnp.float32)

    o_ref[...] = jnp.dot(xa_ref[...].astype(wb_ref.dtype), wb_ref[...],
                         preferred_element_type=jnp.float32).astype(o_ref.dtype)


def _choose_tiles(M, D, out_pad, rank_pad, in_bytes, w_bytes, out_bytes, sub):
    # Lane-dense output tile: largest multiple of 128 dividing the padded out
    # dim, capped at 1024 (wide output DMAs matter most on v5e's 0.8 TB/s).
    units = out_pad // 128
    tn_units = 1
    for d in range(1, units + 1):
        if units % d == 0 and d * 128 <= 1024:
            tn_units = d
    tn = tn_units * 128

    vmem_cap = _vmem_capacity_bytes()
    budget = int(vmem_cap * 0.55)  # headroom for compiler scratch

    # Per-row VMEM cost: double-buffered x + double-buffered out tile
    # + f32 epilogue temp + f32 xa scratch (+ its cast copy).
    per_row = (2 * D * in_bytes
               + 2 * tn * out_bytes
               + tn * 4
               + rank_pad * 4
               + rank_pad * w_bytes)
    # Double-buffered weights (Wa never changes block index; its second buffer
    # is tiny, so we keep the default pipelining rather than Buffered(1)).
    fixed = 2 * (D * rank_pad + rank_pad * tn) * w_bytes

    tm = max(sub, (budget - fixed) // max(per_row, 1))
    tm = min(tm, 2048)                       # amortizes the ~0.35 us/step overhead
    tm = max((tm // sub) * sub, sub)
    tm = min(tm, _round_up(M, sub))          # don't exceed the padded row count

    # v7x megacore: keep >= 2 row blocks when there is enough work so both
    # TensorCores get a share of the (parallel) row axis; the out-feature axis
    # is sequential ("arbitrary") because it carries the xa scratch.
    if M > 2 * sub and _round_up(M, sub) <= tm:
        tm = max(sub, _round_up(_round_up(M, sub) // 2, sub))

    return tm, tn, vmem_cap


def lora_forward(x, wa, wb, scaling):
    """x: [B, N, D]; wa: [D, rank]; wb: [rank, out]. Returns [B, N, out]."""
    B, N, D = x.shape
    rank, out_features = wb.shape
    M = B * N
    x2d = x.reshape(M, D)

    in_bytes = jnp.dtype(x.dtype).itemsize
    w_bytes = jnp.dtype(wb.dtype).itemsize
    out_bytes = in_bytes
    sub = 8 if in_bytes >= 4 else 16   # sublane minimum (f32: 8, bf16: 16)

    # Fold the LoRA scaling into Wb once (removes a (tm, tn) VPU multiply
    # from every kernel invocation).
    wb = (wb.astype(jnp.float32) * scaling).astype(wb.dtype)

    # Zero-pad rank to the sublane minimum so both matmuls land on clean tiles.
    r_sub = 8 if w_bytes >= 4 else 16
    rank_pad = _round_up(rank, r_sub)
    if rank_pad != rank:
        wa = jnp.pad(wa, ((0, 0), (0, rank_pad - rank)))
        wb = jnp.pad(wb, ((0, rank_pad - rank), (0, 0)))

    # Pad out_features to a multiple of 128: stores stay lane-dense (unmasked
    # vst) for any output width; padded columns are sliced off after the call.
    out_pad = _round_up(out_features, 128)
    if out_pad != out_features:
        wb = jnp.pad(wb, ((0, 0), (0, out_pad - out_features)))

    tm, tn, vmem_cap = _choose_tiles(M, D, out_pad, rank_pad,
                                     in_bytes, w_bytes, out_bytes, sub)

    # Pad rows so arbitrary B*N never forces a ragged row tile.
    M_pad = _round_up(M, tm)
    if M_pad != M:
        x2d = jnp.pad(x2d, ((0, M_pad - M), (0, 0)))

    usage = (2 * tm * D * in_bytes              # double-buffered x tile
             + 2 * tm * tn * out_bytes          # double-buffered out tile
             + tm * tn * 4                      # f32 epilogue temp
             + tm * rank_pad * (4 + w_bytes)    # xa scratch + cast copy
             + 2 * D * rank_pad * w_bytes       # Wa (pipeline buffers)
             + 2 * rank_pad * tn * w_bytes)     # Wb (pipeline buffers)
    vmem_limit = int(min(vmem_cap, max(32 << 20, usage + (8 << 20))))

    grid = (M_pad // tm, out_pad // tn)

    out2d = pl.pallas_call(
        _lora_kernel,
        out_shape=jax.ShapeDtypeStruct((M_pad, out_pad), x.dtype),
        grid_spec=pltpu.PrefetchScalarGridSpec(
            num_scalar_prefetch=0,
            grid=grid,
            in_specs=[
                pl.BlockSpec((tm, D), lambda i, j: (i, 0)),
                pl.BlockSpec((D, rank_pad), lambda i, j: (0, 0)),
                pl.BlockSpec((rank_pad, tn), lambda i, j: (0, j)),
            ],
            out_specs=pl.BlockSpec((tm, tn), lambda i, j: (i, j)),
            scratch_shapes=[pltpu.VMEM((tm, rank_pad), jnp.float32)],
        ),
        compiler_params=pltpu.CompilerParams(
            # j carries the xa scratch -> must be sequential; i stays parallel
            # so the v7x megacore shards the row axis.
            dimension_semantics=("parallel", "arbitrary"),
            vmem_limit_bytes=vmem_limit,
        ),
    )(x2d, wa, wb)

    if M_pad != M or out_pad != out_features:
        out2d = out2d[:M, :out_features]
    return out2d.reshape(B, N, out_features)


def init_lora_params(key, in_features, out_features, rank):
    """Matches the PyTorch module's __init__ deterministically.

    lora_A.weight: kaiming_uniform_(a=sqrt(5)) -> U(-1/sqrt(fan_in), 1/sqrt(fan_in))
    lora_B.weight: zeros
    """
    bound = 1.0 / math.sqrt(in_features)  # sqrt(6 / ((1 + 5) * fan_in))
    a_weight = jax.random.uniform(
        key, (rank, in_features), minval=-bound, maxval=bound, dtype=jnp.float32
    )
    b_weight = jnp.zeros((out_features, rank), dtype=jnp.float32)
    # Kernel consumes the transposed weights (x @ Wa then @ Wb).
    wa = a_weight.T  # [in_features, rank]
    wb = b_weight.T  # [rank, out_features]
    return wa, wb


if __name__ == "__main__":
    # dropout=0.0 -> identity at inference; nothing to apply.
    # TODO(synk): dropout > 0 (training mode) would need pltpu.prng_* masking.

    key = jax.random.PRNGKey(0)
    kx, kw, kb, kx2 = jax.random.split(key, 4)

    # --- Test 1: spec-faithful init (lora_B zeros -> output is zero) ---------
    B, N, D = 2, 8, 32
    rank, out_features = 4, 32
    alpha = 1.0
    scaling = alpha / rank

    x = jax.random.normal(kx, (B, N, D), dtype=jnp.float32)
    wa, wb = init_lora_params(kw, D, out_features, rank)

    out = lora_forward(x, wa, wb, scaling)
    jax.block_until_ready(out)
    ref = (x.reshape(-1, D) @ wa @ wb * scaling).reshape(B, N, out_features)
    assert out.shape == (B, N, out_features)
    assert jnp.allclose(out, ref, atol=1e-5, rtol=1e-5)

    # --- Test 2: random Wb so the second matmul path is actually exercised ---
    wb_rand = jax.random.normal(kb, (rank, out_features), dtype=jnp.float32)
    out2 = lora_forward(x, wa, wb_rand, scaling)
    jax.block_until_ready(out2)
    ref2 = (x.reshape(-1, D) @ wa @ wb_rand * scaling).reshape(B, N, out_features)
    assert jnp.allclose(out2, ref2, atol=1e-4, rtol=1e-4)

    # --- Test 3: row padding + multi-block row axis + ragged out_features ----
    B3, N3, D3 = 2, 13, 64          # M = 26 -> 2 row blocks (megacore path)
    rank3, out3 = 4, 384            # out_pad = 384, tn = 384 (lane-dense)
    x3 = jax.random.normal(kx2, (B3, N3, D3), dtype=jnp.float32)
    wa3 = jax.random.normal(kw, (D3, rank3), dtype=jnp.float32) * 0.1
    wb3 = jax.random.normal(kb, (rank3, out3), dtype=jnp.float32) * 0.1
    out3_arr = lora_forward(x3, wa3, wb3, scaling)
    jax.block_until_ready(out3_arr)
    ref3 = (x3.reshape(-1, D3) @ wa3 @ wb3 * scaling).reshape(B3, N3, out3)
    assert out3_arr.shape == (B3, N3, out3)
    assert jnp.allclose(out3_arr, ref3, atol=1e-4, rtol=1e-4)

    # --- Test 4: bf16 I/O path (memory-bound win; f32 MXU accumulation) ------
    x4 = (jax.random.normal(kx2, (2, 8, 64), dtype=jnp.float32) * 0.1).astype(jnp.bfloat16)
    wa4 = (jax.random.normal(kw, (64, 4), dtype=jnp.float32) * 0.1).astype(jnp.bfloat16)
    wb4 = (jax.random.normal(kb, (4, 256), dtype=jnp.float32) * 0.1).astype(jnp.bfloat16)
    out4 = lora_forward(x4, wa4, wb4, scaling)
    jax.block_until_ready(out4)
    ref4 = (x4.astype(jnp.float32).reshape(-1, 64)
            @ wa4.astype(jnp.float32) @ wb4.astype(jnp.float32) * scaling
            ).reshape(2, 8, 256)
    assert out4.dtype == jnp.bfloat16
    assert jnp.allclose(out4.astype(jnp.float32), ref4, atol=2e-2, rtol=2e-2)

    print("KERNEL_OK")
</pallas_src>

<mosaic_0001>
module attributes {stable_mosaic.version = 11 : i64} {
  func.func @_lora_kernel(%arg0: i32, %arg1: i32, %arg2: memref<16x32xf32, #tpu.memory_space<vmem>>, %arg3: memref<32x8xf32, #tpu.memory_space<vmem>>, %arg4: memref<8x128xf32, #tpu.memory_space<vmem>>, %arg5: memref<16x128xf32, #tpu.memory_space<vmem>>, %arg6: memref<16x8xf32, #tpu.memory_space<vmem>>) attributes {dimension_semantics = [#tpu.dimension_semantics<parallel>, #tpu.dimension_semantics<arbitrary>], iteration_bounds = array<i64: 1, 1>, scalar_prefetch = 0 : i64, scratch_operands = 1 : i64, tpu.core_type = #tpu.core_type<tc>, window_params = [{transform_indices = @transform_0, window_bounds = array<i64: 16, 32>}, {pipeline_mode = #tpu.pipeline_mode<synchronous>, transform_indices = @transform_1, window_bounds = array<i64: 32, 8>}, {transform_indices = @transform_2, window_bounds = array<i64: 8, 128>}, {transform_indices = @transform_3, window_bounds = array<i64: 16, 128>}]} {
    %c0_i32 = arith.constant 0 : i32
    %0 = arith.cmpi eq, %arg1, %c0_i32 : i32
    %1 = arith.extui %0 : i1 to i32
    %c0_i32_0 = arith.constant 0 : i32
    %2 = arith.cmpi ne, %1, %c0_i32_0 : i32
    scf.if %2 {
      %c0_6 = arith.constant 0 : index
      %c0_7 = arith.constant 0 : index
      %7 = vector.load %arg2[%c0_6, %c0_7] : memref<16x32xf32, #tpu.memory_space<vmem>>, vector<16x32xf32>
      %c0_8 = arith.constant 0 : index
      %c0_9 = arith.constant 0 : index
      %8 = vector.load %arg3[%c0_8, %c0_9] : memref<32x8xf32, #tpu.memory_space<vmem>>, vector<32x8xf32>
      %cst_10 = arith.constant dense<0.000000e+00> : vector<16x8xf32>
      %9 = tpu.matmul %7, %8, %cst_10 {dimension_numbers = #tpu.dot_dimension_numbers<[1], [0], [0], [1], [0, 0, 1, 1], [], []>} : vector<16x32xf32>, vector<32x8xf32>, vector<16x8xf32> -> vector<16x8xf32>
      %c0_11 = arith.constant 0 : index
      %c0_12 = arith.constant 0 : index
      %10 = vector.load %arg6[%c0_11, %c0_12] : memref<16x8xf32, #tpu.memory_space<vmem>>, vector<16x8xf32>
      tpu.vector_store %arg6[%c0_11, %c0_12], %9 {strides = array<i32>} : memref<16x8xf32, #tpu.memory_space<vmem>>, vector<16x8xf32>,
    } else {
    }
    %c0 = arith.constant 0 : index
    %c0_1 = arith.constant 0 : index
    %3 = vector.load %arg6[%c0, %c0_1] : memref<16x8xf32, #tpu.memory_space<vmem>>, vector<16x8xf32>
    %c0_2 = arith.constant 0 : index
    %c0_3 = arith.constant 0 : index
    %4 = vector.load %arg4[%c0_2, %c0_3] : memref<8x128xf32, #tpu.memory_space<vmem>>, vector<8x128xf32>
    %cst = arith.constant dense<0.000000e+00> : vector<16x128xf32>
    %5 = tpu.matmul %3, %4, %cst {dimension_numbers = #tpu.dot_dimension_numbers<[1], [0], [0], [1], [0, 0, 1, 1], [], []>} : vector<16x8xf32>, vector<8x128xf32>, vector<16x128xf32> -> vector<16x128xf32>
    %c0_4 = arith.constant 0 : index
    %c0_5 = arith.constant 0 : index
    %6 = vector.load %arg5[%c0_4, %c0_5] : memref<16x128xf32, #tpu.memory_space<vmem>>, vector<16x128xf32>
    tpu.vector_store %arg5[%c0_4, %c0_5], %5 {strides = array<i32>} : memref<16x128xf32, #tpu.memory_space<vmem>>, vector<16x128xf32>,
    return
  }
  func.func @transform_0(%arg0: i32, %arg1: i32) -> (i32, i32) {
    %c0_i32 = arith.constant 0 : i32
    %c0_i32_0 = arith.constant 0 : i32
    return %arg0, %c0_i32 : i32, i32
  }
  func.func @transform_1(%arg0: i32, %arg1: i32) -> (i32, i32) {
    %c0_i32 = arith.constant 0 : i32
    %c0_i32_0 = arith.constant 0 : i32
    %c0_i32_1 = arith.constant 0 : i32
    return %c0_i32, %c0_i32_0 : i32, i32
  }
  func.func @transform_2(%arg0: i32, %arg1: i32) -> (i32, i32) {
    %c0_i32 = arith.constant 0 : i32
    %c0_i32_0 = arith.constant 0 : i32
    return %c0_i32, %arg1 : i32, i32
  }
  func.func @transform_3(%arg0: i32, %arg1: i32) -> (i32, i32) {
    %c0_i32 = arith.constant 0 : i32
    return %arg0, %arg1 : i32, i32
  }
}

</mosaic_0001>

<llo_original>
// kernel: tpu_custom_call.1
$region0: #{tpu_custom_call.1}
  #allocation0 [shape = 'u32[]', space=smem, size = 0x4, offset = 0x4, fixed_abs, tag = 'smem constant byte address 0x4 - core index']
  #allocation1 [shape = 'u32[144,128]{1,0:T(1,128)}', space=vmem, size = 0x12000, scoped, tag = 'internal scratch']
  #allocation2 [shape = 'f32[16,8]{1,0:T(8,128)}', space=vmem, size = 0x2000, scoped, tag = 'scratch operand']
  %s0 = inlined_call_operand.vmem [shape: f32[16,32], index: 0, kind: input, shape index: {}]
  %s1 = inlined_call_operand.vmem [shape: f32[32,8], index: 1, kind: input, shape index: {}]
  %s2 = inlined_call_operand.vmem [shape: f32[8,128], index: 2, kind: input, shape index: {}]
  %s3 = inlined_call_operand.hbm [shape: f32[16,128], index: 3, kind: output, shape index: {}]
  %s4 = sld [smem:[#allocation0]]
  $region26: #{tpu_custom_call.1} parent=0
    _
  %s6 = ssub.s32 1, %s4
  %s7 = scalar_select 0, %s6, %s4
  $region1: #{tpu_custom_call.1} parent=0
    #allocation3 [shape = 'u8[8192]{0}', space=vmem, size = 0x2000, scoped, tag = 'output window, operand 0, single buffered']
    #allocation4 [shape = 's32[1]{0}', space=sflag, size = 0x4, scoped, tag = 'scoped memory for tpu_custom_call.1']
    %8 = vsyncpa [#allocation4], 0
    // Predicated region
    $region2: #{tpu_custom_call.1} parent=1 // pred_check
      _
    $region3: #{tpu_custom_call.1} parent=1 // pred_check_branch
      %10 = sbr.rel (0) target = $region5
    $region4: #{tpu_custom_call.1} parent=1 // pred_region
      _
    $region5: #{tpu_custom_call.1} parent=1 // pred_fallthru
      _
    // Predicated region
    $region6: #{tpu_custom_call.1} parent=1 // pred_check
      _
    $region7: #{tpu_custom_call.1} parent=1 // pred_check_branch
      %12 = sbr.rel (0) target = $region9
    $region8: #{tpu_custom_call.1} parent=1 // pred_region
      _
    $region9: #{tpu_custom_call.1} parent=1 // pred_fallthru
      _
    // Predicated region
    $region10: #{tpu_custom_call.1} parent=1 // pred_check
      _
    $region11: #{tpu_custom_call.1} parent=1 // pred_check_branch
      %14 = sbr.rel (0) target = $region13
    $region12: #{tpu_custom_call.1} parent=1 // pred_region
      _
    $region13: #{tpu_custom_call.1} parent=1 // pred_fallthru
      _
    %p15 = scmp.eq.s32.totalorder 0, 0
    // Predicated region
    $region14: #{tpu_custom_call.1} parent=1 // pred_check
      %p16 = pneg %p15
    $region15: #{tpu_custom_call.1} parent=1 // pred_check_branch
      %18 = sbr.rel (%p16) target = $region17
    $region16: #{tpu_custom_call.1} parent=1 // pred_region
      %v19 = vld [vmem:[%s0] sm:$0xff]
      %v20 = vld [vmem:[%s0 + $0x8] sm:$0xff]
      %v21 = vld [vmem:[%s1] sm:$0xff]
      %v22 = vld [vmem:[%s1 + $0x8] sm:$0xff]
      %v23 = vld [vmem:[%s1 + $0x10] sm:$0xff]
      %v24 = vld [vmem:[%s1 + $0x18] sm:$0xff]
      %vm25 = vcmask 261120
      %v27 = vsel %vm25, %v19, 0
      %v30 = vsel %vm25, %v20, 0
      %32 = vmatprep.subr.mxu0 0.0
      %33 = vmatpush1.msra.mxu0 %v21
      %34 = vmatprep.subr.mxu0 0.0
      %35 = vmatpush1.msra.mxu0 %v22
      %36 = vmatprep.subr.mxu0 0.0
      %37 = vmatpush1.msra.mxu0 %v23
      %38 = vmatprep.subr.mxu0 0.0
      %39 = vmatpush1.msra.mxu0 %v24
      %40 = vmatprep.subr.mxu0 0.0
      %41 = vmatpush1.msra.mxu0 0.0
      %42 = vmatprep.subr.mxu0 0.0
      %43 = vmatpush1.msra.mxu0 0.0
      %44 = vmatprep.subr.mxu0 0.0
      %45 = vmatpush1.msra.mxu0 0.0
      %46 = vmatprep.subr.mxu0 0.0
      %47 = vmatpush1.msra.mxu0 0.0
      %48 = vmatprep.subr.mxu0 0.0
      %49 = vmatpush1.msra.mxu0 0.0
      %50 = vmatprep.subr.mxu0 0.0
      %51 = vmatpush1.msra.mxu0 0.0
      %52 = vmatprep.subr.mxu0 0.0
      %53 = vmatpush1.msra.mxu0 0.0
      %54 = vmatprep.subr.mxu0 0.0
      %55 = vmatpush1.msra.mxu0 0.0
      %56 = vmatprep.subr.mxu0 0.0
      %57 = vmatpush1.msra.mxu0 0.0
      %58 = vmatprep.subr.mxu0 0.0
      %59 = vmatpush1.msra.mxu0 0.0
      %60 = vmatprep.subr.mxu0 0.0
      %61 = vmatpush1.msra.mxu0 0.0
      %62 = vmatprep.subr.mxu0 0.0
      %63 = vmatpush1.msra.mxu0 0.0
      %64 = vmatprep.subr.mxu0 0.0
      %65 = vmatpush1.msra.mxu0 0.0
      %66 = vmatprep.subr.mxu0 0.0
      %67 = vmatpush1.msra.mxu0 0.0
      %68 = vmatprep.subr.mxu0 0.0
      %69 = vmatpush1.msra.mxu0 0.0
      %70 = vmatprep.subr.mxu0 0.0
      %71 = vmatpush1.msra.mxu0 0.0
      %72 = vmatprep.subr.mxu0 0.0
      %73 = vmatpush1.msra.mxu0 0.0
      %74 = vmatprep.subr.mxu0 0.0
      %75 = vmatpush1.msra.mxu0 0.0
      %76 = vmatprep.subr.mxu0 0.0
      %77 = vmatpush1.msra.mxu0 0.0
      %78 = vmatprep.subr.mxu0 0.0
      %79 = vmatpush1.msra.mxu0 0.0
      %80 = vmatprep.subr.mxu0 0.0
      %81 = vmatpush1.msra.mxu0 0.0
      %82 = vmatprep.subr.mxu0 0.0
      %83 = vmatpush1.msra.mxu0 0.0
      %84 = vmatprep.subr.mxu0 0.0
      %85 = vmatpush1.msra.mxu0 0.0
      %86 = vmatprep.subr.mxu0 0.0
      %87 = vmatpush1.msra.mxu0 0.0
      %88 = vmatprep.subr.mxu0 0.0
      %89 = vmatpush1.msra.mxu0 0.0
      %90 = vmatprep.subr.mxu0 0.0
      %91 = vmatpush1.msra.mxu0 0.0
      %92 = vmatprep.subr.mxu0 0.0
      %93 = vmatpush1.msra.mxu0 0.0
      %94 = vmatprep.subr.mxu0 0.0
      %95 = vmatpush1.msra.mxu0 0.0
      %96 = vmatprep.mubr.f32.mxu0 0.0
      %97 = vmatmul.mubr.f32.gmra.mrb[0].mxu0 %v27
      %v98 = vpop.f32.mrb[0].mxu0
      %v99 = vadd.f32 0.0, %v98
      %v100 = vpop.f32.mrb[0].mxu0
      %101 = vmatprep.mubr.f32.mxu0 0.0
      %102 = vmatmul.mubr.f32.gmra.mrb[0].mxu0 %v30
      %v103 = vpop.f32.mrb[0].mxu0
      %v104 = vadd.f32 0.0, %v103
      %v105 = vpop.f32.mrb[0].mxu0
      %106 = vdwg.mxu0
      %vm107 = vcmask 64512
      %108 = vst.msk [vmem:[#allocation2] sm:$0xff] %vm107, %v99
      %109 = vst.msk [vmem:[#allocation2 + $0x8] sm:$0xff] %vm107, %v104
    $region17: #{tpu_custom_call.1} parent=1 // pred_fallthru
      _
    %v110 = vld [vmem:[#allocation2] sm:$0xff]
    %v111 = vld [vmem:[#allocation2 + $0x8] sm:$0xff]
    %v112 = vld [vmem:[%s2] sm:$0xff]
    %vm113 = vcmask 64512
    %v115 = vsel %vm113, %v110, 0
    %v118 = vsel %vm113, %v111, 0
    %120 = vmatprep.subr.mxu0 0.0
    %121 = vmatpush1.msra.mxu0 %v112
    %122 = vmatprep.subr.mxu0 0.0
    %123 = vmatpush1.msra.mxu0 0.0
    %124 = vmatprep.subr.mxu0 0.0
    %125 = vmatpush1.msra.mxu0 0.0
    %126 = vmatprep.subr.mxu0 0.0
    %127 = vmatpush1.msra.mxu0 0.0
    %128 = vmatprep.subr.mxu0 0.0
    %129 = vmatpush1.msra.mxu0 0.0
    %130 = vmatprep.subr.mxu0 0.0
    %131 = vmatpush1.msra.mxu0 0.0
    %132 = vmatprep.subr.mxu0 0.0
    %133 = vmatpush1.msra.mxu0 0.0
    %134 = vmatprep.subr.mxu0 0.0
    %135 = vmatpush1.msra.mxu0 0.0
    %136 = vmatprep.subr.mxu0 0.0
    %137 = vmatpush1.msra.mxu0 0.0
    %138 = vmatprep.subr.mxu0 0.0
    %139 = vmatpush1.msra.mxu0 0.0
    %140 = vmatprep.subr.mxu0 0.0
    %141 = vmatpush1.msra.mxu0 0.0
    %142 = vmatprep.subr.mxu0 0.0
    %143 = vmatpush1.msra.mxu0 0.0
    %144 = vmatprep.subr.mxu0 0.0
    %145 = vmatpush1.msra.mxu0 0.0
    %146 = vmatprep.subr.mxu0 0.0
    %147 = vmatpush1.msra.mxu0 0.0
    %148 = vmatprep.subr.mxu0 0.0
    %149 = vmatpush1.msra.mxu0 0.0
    %150 = vmatprep.subr.mxu0 0.0
    %151 = vmatpush1.msra.mxu0 0.0
    %152 = vmatprep.subr.mxu0 0.0
    %153 = vmatpush1.msra.mxu0 0.0
    %154 = vmatprep.subr.mxu0 0.0
    %155 = vmatpush1.msra.mxu0 0.0
    %156 = vmatprep.subr.mxu0 0.0
    %157 = vmatpush1.msra.mxu0 0.0
    %158 = vmatprep.subr.mxu0 0.0
    %159 = vmatpush1.msra.mxu0 0.0
    %160 = vmatprep.subr.mxu0 0.0
    %161 = vmatpush1.msra.mxu0 0.0
    %162 = vmatprep.subr.mxu0 0.0
    %163 = vmatpush1.msra.mxu0 0.0
    %164 = vmatprep.subr.mxu0 0.0
    %165 = vmatpush1.msra.mxu0 0.0
    %166 = vmatprep.subr.mxu0 0.0
    %167 = vmatpush1.msra.mxu0 0.0
    %168 = vmatprep.subr.mxu0 0.0
    %169 = vmatpush1.msra.mxu0 0.0
    %170 = vmatprep.subr.mxu0 0.0
    %171 = vmatpush1.msra.mxu0 0.0
    %172 = vmatprep.subr.mxu0 0.0
    %173 = vmatpush1.msra.mxu0 0.0
    %174 = vmatprep.subr.mxu0 0.0
    %175 = vmatpush1.msra.mxu0 0.0
    %176 = vmatprep.subr.mxu0 0.0
    %177 = vmatpush1.msra.mxu0 0.0
    %178 = vmatprep.subr.mxu0 0.0
    %179 = vmatpush1.msra.mxu0 0.0
    %180 = vmatprep.subr.mxu0 0.0
    %181 = vmatpush1.msra.mxu0 0.0
    %182 = vmatprep.subr.mxu0 0.0
    %183 = vmatpush1.msra.mxu0 0.0
    %184 = vmatprep.mubr.f32.mxu0 0.0
    %185 = vmatmul.mubr.f32.gmra.mrb[0].mxu0 %v115
    %v186 = vpop.f32.mrb[0].mxu0
    %v187 = vadd.f32 0.0, %v186
    %v188 = vpop.f32.mrb[0].mxu0
    %189 = vmatprep.mubr.f32.mxu0 0.0
    %190 = vmatmul.mubr.f32.gmra.mrb[0].mxu0 %v118
    %v191 = vpop.f32.mrb[0].mxu0
    %v192 = vadd.f32 0.0, %v191
    %v193 = vpop.f32.mrb[0].mxu0
    %194 = vdwg.mxu0
    %195 = vst [vmem:[#allocation3] sm:$0xff] %v187
    %196 = vst [vmem:[#allocation3 + $0x8] sm:$0xff] %v192
    // Predicated region
    $region18: #{tpu_custom_call.1} parent=1 // pred_check
      _
    $region19: #{tpu_custom_call.1} parent=1 // pred_check_branch
      %198 = sbr.rel (0) target = $region21
    $region20: #{tpu_custom_call.1} parent=1 // pred_region
      %s200 = ssub.s32 256, 256
      %201 = vsyncadd [#allocation4], %s200
      %s202 = sshll.u32 [#allocation3], 4
      %s203 = int_to_ptr.vmem [resolvable:$true] %s202
      %208 = dma.vmem_to_hbm [thread:$0]  %s203, 256, %s3, [#allocation4], 128, 128, 8
    $region21: #{tpu_custom_call.1} parent=1 // pred_fallthru
      _
    // Predicated region
    $region22: #{tpu_custom_call.1} parent=1 // pred_check
      _
    $region23: #{tpu_custom_call.1} parent=1 // pred_check_branch
      %210 = sbr.rel (0) target = $region25
    $region24: #{tpu_custom_call.1} parent=1 // pred_region
      %211 = dma.done [#allocation4], 256
    $region25: #{tpu_custom_call.1} parent=1 // pred_fallthru
      _
    %212 = vsyncpa [#allocation4], 1

</llo_original>
